<compile_context>
chip_gen: v5e
topology: v5e:2x2
jax: 0.10.0
libtpu: 0.0.40
codegen_flags: <defaults>
</compile_context>

<pallas_src>
import jax
import jax.numpy as jnp
from jax.experimental import pallas as pl
from jax.experimental.pallas import tpu as pltpu


def _round_up(x, m):
    return (x + m - 1) // m * m


def _nk_padding_and_tiles(n, k):
    """Padded sizes + tile sizes for the N (output) and K (reduction) dims."""
    # N: one lane-dense tile up to 1024 wide so X is streamed from HBM once.
    n_pad = _round_up(max(n, 128), 128)
    if n_pad <= 1024:
        tn = n_pad
    else:
        n_pad = _round_up(n_pad, 512)
        tn = 512

    # K: pad only to 128.  Single K step up to 2048; otherwise the largest
    # 128-multiple tile <= 2048 that divides K_pad (zero extra MXU work).
    k_pad = _round_up(max(k, 128), 128)
    if k_pad <= 2048:
        tk = k_pad
    else:
        tk = 128
        for d in range(16, 0, -1):
            if k_pad % (128 * d) == 0:
                tk = 128 * d
                break
        if tk < 1024:
            # Awkward K: prefer one big tile with a little zero pad over many
            # tiny accumulator RMW passes.
            k_pad = _round_up(k_pad, 2048)
            tk = 2048
    return n_pad, tn, k_pad, tk


def _m_padding_and_tile(b):
    if b <= 128:
        tm = max(16, _round_up(b, 8))   # >= 16 rows: full packed bf16 vregs
    elif b <= 256:
        tm = 128                        # MXU row granularity
    else:
        tm = 256
    m_pad = _round_up(b, tm)
    return m_pad, tm


def _vmem_limit_bytes(tile_bytes_needed):
    """Scoped-VMEM request sized from the actual tile footprint, per chip."""
    want = int(tile_bytes_needed) + (8 << 20)          # headroom
    try:
        cap = int(pltpu.get_tpu_info().vmem_capacity_bytes)
        ceiling = cap * 3 // 4
    except Exception:                                  # pragma: no cover
        ceiling = 48 << 20                             # safe even on v7x (64 MiB)
    return max(32 << 20, min(want, ceiling))


def prepare_params(weight, bias, compute_dtype=jnp.bfloat16):
    """One-time parameter preparation (at init time, NOT per call).

    weight: (n_embd, input_dim) PyTorch nn.Linear layout; bias: (n_embd,).
    Returns:
      w_kn: (K_pad, N_pad) compute_dtype, pre-transposed and zero-padded.
      b2d : (1, N_pad)  f32, zero-padded bias.
    """
    n, k = weight.shape
    n_pad, _, k_pad, _ = _nk_padding_and_tiles(n, k)
    w_kn = jnp.pad(weight.T.astype(compute_dtype),
                   ((0, k_pad - k), (0, n_pad - n)))
    b2d = jnp.pad(bias.astype(jnp.float32), (0, n_pad - n)).reshape(1, n_pad)
    return w_kn, b2d


def _matmul_bias_kernel_f32out(x_ref, w_ref, b_ref, o_ref):
    """f32 output: accumulate directly into the VMEM-resident output block."""
    k_step = pl.program_id(2)

    @pl.when(k_step == 0)
    def _():
        o_ref[...] = jnp.zeros_like(o_ref)

    o_ref[...] += jnp.dot(x_ref[...], w_ref[...],
                          preferred_element_type=jnp.float32)

    @pl.when(k_step == pl.num_programs(2) - 1)
    def _():
        o_ref[...] = o_ref[...] + b_ref[...]


def _matmul_bias_kernel_acc(x_ref, w_ref, b_ref, o_ref, acc_ref):
    """Reduced-precision output: keep an f32 scratch accumulator."""
    k_step = pl.program_id(2)

    @pl.when(k_step == 0)
    def _():
        acc_ref[...] = jnp.zeros_like(acc_ref)

    acc_ref[...] += jnp.dot(x_ref[...], w_ref[...],
                            preferred_element_type=jnp.float32)

    @pl.when(k_step == pl.num_programs(2) - 1)
    def _():
        o_ref[...] = (acc_ref[...] + b_ref[...]).astype(o_ref.dtype)


def input_layer_forward(x, w_kn, b2d, *, n_embd, out_dtype=jnp.float32):
    """x: (B, ...) activation; w_kn/b2d from prepare_params. Returns (B, n_embd)."""
    b = x.shape[0]
    x2d = x.reshape(b, -1)                  # nn.Flatten(start_dim=1)
    k = x2d.shape[1]

    n_pad, tn, k_pad, tk = _nk_padding_and_tiles(n_embd, k)
    assert w_kn.shape == (k_pad, n_pad), \
        "params not prepared for this input_dim / n_embd"
    m_pad, tm = _m_padding_and_tile(b)

    # v7x megacore: if the M x N grid would be a single block, split N (or M)
    # in two so both TensorCores get work (costs at most one extra X stream).
    if m_pad // tm == 1 and n_pad // tn == 1:
        if tn >= 256 and (tn // 2) % 128 == 0:
            tn //= 2
        elif tm >= 256 and (tm // 2) % 128 == 0:
            tm //= 2

    # Cast once; skip the pad pass entirely if no padding is required.
    x2d = x2d.astype(w_kn.dtype)
    if m_pad != b or k_pad != k:
        x2d = jnp.pad(x2d, ((0, m_pad - b), (0, k_pad - k)))

    grid = (m_pad // tm, n_pad // tn, k_pad // tk)

    out_itemsize = jnp.dtype(out_dtype).itemsize
    x_bytes = m_pad * k_pad * x2d.dtype.itemsize
    w_bytes = k_pad * n_pad * w_kn.dtype.itemsize
    out_bytes = m_pad * n_pad * out_itemsize
    cost = pl.CostEstimate(
        flops=2 * m_pad * k_pad * n_pad,
        transcendentals=0,
        # account for re-streaming X across N tiles and W across M tiles
        bytes_accessed=(x_bytes * (n_pad // tn)
                        + w_bytes * (m_pad // tm)
                        + out_bytes + n_pad * 4),
    )

    # Double-buffered x / w / bias tiles + (double-buffered) resident output.
    tile_bytes = (2 * tm * tk * x2d.dtype.itemsize
                  + 2 * tk * tn * w_kn.dtype.itemsize
                  + 2 * tn * 4
                  + 2 * tm * tn * out_itemsize)

    if out_dtype == jnp.float32:
        kernel = _matmul_bias_kernel_f32out
        scratch_shapes = []
    else:
        kernel = _matmul_bias_kernel_acc
        scratch_shapes = [pltpu.VMEM((tm, tn), jnp.float32)]
        tile_bytes += tm * tn * 4

    out_padded = pl.pallas_call(
        kernel,
        out_shape=jax.ShapeDtypeStruct((m_pad, n_pad), out_dtype),
        grid_spec=pltpu.PrefetchScalarGridSpec(
            num_scalar_prefetch=0,
            grid=grid,
            in_specs=[
                pl.BlockSpec((tm, tk), lambda i, j, kk: (i, kk)),
                pl.BlockSpec((tk, tn), lambda i, j, kk: (kk, j)),
                pl.BlockSpec((1, tn), lambda i, j, kk: (0, j)),
            ],
            out_specs=pl.BlockSpec((tm, tn), lambda i, j, kk: (i, j)),
            scratch_shapes=scratch_shapes,
        ),
        compiler_params=pltpu.CompilerParams(
            dimension_semantics=("parallel", "parallel", "arbitrary"),
            vmem_limit_bytes=_vmem_limit_bytes(tile_bytes),
        ),
        cost_estimate=cost,
    )(x2d, w_kn, b2d)

    return out_padded[:b, :n_embd]


if __name__ == "__main__":
    key = jax.random.PRNGKey(0)
    k_x, k_w, k_b = jax.random.split(key, 3)

    # Small shapes consistent with the module: batch=2, channels=4, spatial=16
    B, C, H, W = 2, 4, 16, 16
    input_dim = C * H * W                      # 1024
    n_embd = 32

    x = jax.random.normal(k_x, (B, C, H, W), dtype=jnp.float32)

    # PyTorch nn.Linear param shapes: W (n_embd, input_dim), b (n_embd,)
    bound = 1.0 / (input_dim ** 0.5)
    weight = jax.random.uniform(k_w, (n_embd, input_dim), jnp.float32, -bound, bound)
    bias = jax.random.uniform(k_b, (n_embd,), jnp.float32, -bound, bound)

    # One-time parameter prep (pre-transpose, pad, bf16 cast).
    w_kn, b2d = prepare_params(weight, bias)

    fwd = jax.jit(input_layer_forward, static_argnames=("n_embd",))
    out = fwd(x, w_kn, b2d, n_embd=n_embd)
    jax.block_until_ready(out)

    # References: bf16-quantized operands with f32 accumulation (matches the
    # MXU path), plus a looser check against the full-f32 PyTorch semantics.
    x2d = x.reshape(B, -1)
    ref_bf16 = (x2d.astype(jnp.bfloat16).astype(jnp.float32)
                @ weight.astype(jnp.bfloat16).astype(jnp.float32).T) + bias
    ref_f32 = x2d @ weight.T + bias

    assert out.shape == (B, n_embd)
    assert out.dtype == jnp.float32
    assert jnp.allclose(out, ref_bf16, atol=1e-2, rtol=1e-2)
    assert jnp.allclose(out, ref_f32, atol=5e-2, rtol=5e-2)

    print("KERNEL_OK")
</pallas_src>

<mosaic_0001>
module attributes {stable_mosaic.version = 11 : i64} {
  func.func @_matmul_bias_kernel_f32out(%arg0: i32, %arg1: i32, %arg2: i32, %arg3: memref<16x1024xbf16, #tpu.memory_space<vmem>>, %arg4: memref<1024x128xbf16, #tpu.memory_space<vmem>>, %arg5: memref<1x128xf32, #tpu.memory_space<vmem>>, %arg6: memref<16x128xf32, #tpu.memory_space<vmem>>) attributes {dimension_semantics = [#tpu.dimension_semantics<parallel>, #tpu.dimension_semantics<parallel>, #tpu.dimension_semantics<arbitrary>], iteration_bounds = array<i64: 1, 1, 1>, scalar_prefetch = 0 : i64, scratch_operands = 0 : i64, tpu.core_type = #tpu.core_type<tc>, window_params = [{transform_indices = @transform_0, window_bounds = array<i64: 16, 1024>}, {transform_indices = @transform_1, window_bounds = array<i64: 1024, 128>}, {transform_indices = @transform_2, window_bounds = array<i64: 1, 128>}, {transform_indices = @transform_3, window_bounds = array<i64: 16, 128>}]} {
    %c0_i32 = arith.constant 0 : i32
    %0 = arith.cmpi eq, %arg2, %c0_i32 : i32
    %1 = arith.extui %0 : i1 to i32
    %c0_i32_0 = arith.constant 0 : i32
    %2 = arith.cmpi ne, %1, %c0_i32_0 : i32
    scf.if %2 {
      %cst_10 = arith.constant 0.000000e+00 : f32
      %12 = vector.broadcast %cst_10 : f32 to vector<16x128xf32>
      %c0_11 = arith.constant 0 : index
      %c0_12 = arith.constant 0 : index
      %13 = vector.load %arg6[%c0_11, %c0_12] : memref<16x128xf32, #tpu.memory_space<vmem>>, vector<16x128xf32>
      tpu.vector_store %arg6[%c0_11, %c0_12], %12 {strides = array<i32>} : memref<16x128xf32, #tpu.memory_space<vmem>>, vector<16x128xf32>,
    } else {
    }
    %c0 = arith.constant 0 : index
    %c0_1 = arith.constant 0 : index
    %3 = vector.load %arg6[%c0, %c0_1] : memref<16x128xf32, #tpu.memory_space<vmem>>, vector<16x128xf32>
    %c0_2 = arith.constant 0 : index
    %c0_3 = arith.constant 0 : index
    %4 = vector.load %arg3[%c0_2, %c0_3] : memref<16x1024xbf16, #tpu.memory_space<vmem>>, vector<16x1024xbf16>
    %c0_4 = arith.constant 0 : index
    %c0_5 = arith.constant 0 : index
    %5 = vector.load %arg4[%c0_4, %c0_5] : memref<1024x128xbf16, #tpu.memory_space<vmem>>, vector<1024x128xbf16>
    %cst = arith.constant dense<0.000000e+00> : vector<16x128xf32>
    %6 = tpu.matmul %4, %5, %cst {dimension_numbers = #tpu.dot_dimension_numbers<[1], [0], [0], [1], [0, 0, 1, 1], [], []>} : vector<16x1024xbf16>, vector<1024x128xbf16>, vector<16x128xf32> -> vector<16x128xf32>
    %7 = arith.addf %3, %6 : vector<16x128xf32>
    %c0_6 = arith.constant 0 : index
    %c0_7 = arith.constant 0 : index
    %8 = vector.load %arg6[%c0_6, %c0_7] : memref<16x128xf32, #tpu.memory_space<vmem>>, vector<16x128xf32>
    tpu.vector_store %arg6[%c0_6, %c0_7], %7 {strides = array<i32>} : memref<16x128xf32, #tpu.memory_space<vmem>>, vector<16x128xf32>,
    %c0_i32_8 = arith.constant 0 : i32
    %9 = arith.cmpi eq, %arg2, %c0_i32_8 : i32
    %10 = arith.extui %9 : i1 to i32
    %c0_i32_9 = arith.constant 0 : i32
    %11 = arith.cmpi ne, %10, %c0_i32_9 : i32
    scf.if %11 {
      %c0_10 = arith.constant 0 : index
      %c0_11 = arith.constant 0 : index
      %12 = vector.load %arg6[%c0_10, %c0_11] : memref<16x128xf32, #tpu.memory_space<vmem>>, vector<16x128xf32>
      %c0_12 = arith.constant 0 : index
      %c0_13 = arith.constant 0 : index
      %13 = vector.load %arg5[%c0_12, %c0_13] : memref<1x128xf32, #tpu.memory_space<vmem>>, vector<1x128xf32>
      %14 = vector.broadcast %13 : vector<1x128xf32> to vector<16x128xf32>
      %15 = arith.addf %12, %14 : vector<16x128xf32>
      %c0_14 = arith.constant 0 : index
      %c0_15 = arith.constant 0 : index
      %16 = vector.load %arg6[%c0_14, %c0_15] : memref<16x128xf32, #tpu.memory_space<vmem>>, vector<16x128xf32>
      tpu.vector_store %arg6[%c0_14, %c0_15], %15 {strides = array<i32>} : memref<16x128xf32, #tpu.memory_space<vmem>>, vector<16x128xf32>,
    } else {
    }
    return
  }
  func.func @transform_0(%arg0: i32, %arg1: i32, %arg2: i32) -> (i32, i32) {
    %c0_i32 = arith.constant 0 : i32
    return %arg0, %arg2 : i32, i32
  }
  func.func @transform_1(%arg0: i32, %arg1: i32, %arg2: i32) -> (i32, i32) {
    %c0_i32 = arith.constant 0 : i32
    return %arg2, %arg1 : i32, i32
  }
  func.func @transform_2(%arg0: i32, %arg1: i32, %arg2: i32) -> (i32, i32) {
    %c0_i32 = arith.constant 0 : i32
    %c0_i32_0 = arith.constant 0 : i32
    return %c0_i32, %arg1 : i32, i32
  }
  func.func @transform_3(%arg0: i32, %arg1: i32, %arg2: i32) -> (i32, i32) {
    %c0_i32 = arith.constant 0 : i32
    return %arg0, %arg1 : i32, i32
  }
}

</mosaic_0001>

<llo_original>
// kernel: input_layer_forward.1
$region0: #{input_layer_forward.1}
  #allocation0 [shape = 'u32[]', space=smem, size = 0x4, offset = 0x4, fixed_abs, tag = 'smem constant byte address 0x4 - core index']
  #allocation1 [shape = 'u32[72,128]{1,0:T(1,128)}', space=vmem, size = 0x9000, scoped, tag = 'internal scratch']
  %s0 = inlined_call_operand.vmem [shape: bf16[16,1024], index: 0, kind: input, shape index: {}]
  %s1 = inlined_call_operand.hbm [shape: bf16[1024,128], index: 1, kind: input, shape index: {}]
  %s2 = inlined_call_operand.vmem [shape: f32[1,128], index: 2, kind: input, shape index: {}]
  %s3 = inlined_call_operand.vmem [shape: f32[16,128], index: 3, kind: output, shape index: {}]
  %s4 = sld [smem:[#allocation0]]
  $region34: #{input_layer_forward.1} parent=0
    _
  %s6 = ssub.s32 1, %s4
  %s7 = scalar_select 0, %s6, %s4
  $region1: #{input_layer_forward.1} parent=0
    #allocation2 [shape = 'u8[262144]{0}', space=vmem, size = 0x40000, scoped, tag = 'input window, operand 1, single buffered']
    #allocation3 [shape = 's32[1]{0}', space=sflag, size = 0x4, scoped, tag = 'scoped memory for input_layer_forward.1']
    %8 = vsyncpa [#allocation3], 0
    // Predicated region
    $region2: #{input_layer_forward.1} parent=1 // pred_check
      _
    $region3: #{input_layer_forward.1} parent=1 // pred_check_branch
      %10 = sbr.rel (0) target = $region5
    $region4: #{input_layer_forward.1} parent=1 // pred_region
      _
    $region5: #{input_layer_forward.1} parent=1 // pred_fallthru
      _
    // Predicated region
    $region6: #{input_layer_forward.1} parent=1 // pred_check
      _
    $region7: #{input_layer_forward.1} parent=1 // pred_check_branch
      %12 = sbr.rel (0) target = $region9
    $region8: #{input_layer_forward.1} parent=1 // pred_region
      %14 = vsyncadd [#allocation3], 0
      %s15 = sshll.u32 %s1, 4
      %s16 = int_to_ptr.hbm [resolvable:$true] %s15
      %s17 = sshll.u32 [#allocation2], 4
      %s18 = int_to_ptr.vmem [resolvable:$true] %s17
      %23 = dma.hbm_to_vmem [thread:$0]  %s16, 8192, %s18, [#allocation3], 64, 64, 4
    $region9: #{input_layer_forward.1} parent=1 // pred_fallthru
      _
    // Predicated region
    $region10: #{input_layer_forward.1} parent=1 // pred_check
      _
    $region11: #{input_layer_forward.1} parent=1 // pred_check_branch
      %25 = sbr.rel (0) target = $region13
    $region12: #{input_layer_forward.1} parent=1 // pred_region
      _
    $region13: #{input_layer_forward.1} parent=1 // pred_fallthru
      _
    // Predicated region
    $region14: #{input_layer_forward.1} parent=1 // pred_check
      _
    $region15: #{input_layer_forward.1} parent=1 // pred_check_branch
      %27 = sbr.rel (0) target = $region17
    $region16: #{input_layer_forward.1} parent=1 // pred_region
      %29 = dma.done [#allocation3], 8192
    $region17: #{input_layer_forward.1} parent=1 // pred_fallthru
      _
    %p30 = scmp.eq.s32.totalorder 0, 0
    // Predicated region
    $region18: #{input_layer_forward.1} parent=1 // pred_check
      %p31 = pneg %p30
    $region19: #{input_layer_forward.1} parent=1 // pred_check_branch
      %33 = sbr.rel (%p31) target = $region21
    $region20: #{input_layer_forward.1} parent=1 // pred_region
      %34 = vst [vmem:[%s3] sm:$0xff] 0.0
      %35 = vst [vmem:[%s3 + $0x8] sm:$0xff] 0.0
    $region21: #{input_layer_forward.1} parent=1 // pred_fallthru
      _
    %v36 = vld [vmem:[%s3] sm:$0xff]
    %v37 = vld [vmem:[%s3 + $0x8] sm:$0xff]
    %v38 = vld [vmem:[%s0] sm:$0xff]
    %v39 = vld [vmem:[%s0 + $0x8] sm:$0xff]
    %v40 = vld [vmem:[%s0 + $0x10] sm:$0xff]
    %v41 = vld [vmem:[%s0 + $0x18] sm:$0xff]
    %v42 = vld [vmem:[%s0 + $0x20] sm:$0xff]
    %v43 = vld [vmem:[%s0 + $0x28] sm:$0xff]
    %v44 = vld [vmem:[%s0 + $0x30] sm:$0xff]
    %v45 = vld [vmem:[%s0 + $0x38] sm:$0xff]
    %v46 = vld [vmem:[#allocation2] sm:$0xf]
    %v47 = vld [vmem:[#allocation2 + $0x4] sm:$0xf]
    %v48 = vld [vmem:[#allocation2 + $0x8] sm:$0xf]
    %v49 = vld [vmem:[#allocation2 + $0xc] sm:$0xf]
    %v50 = vld [vmem:[#allocation2 + $0x10] sm:$0xf]
    %v51 = vld [vmem:[#allocation2 + $0x14] sm:$0xf]
    %v52 = vld [vmem:[#allocation2 + $0x18] sm:$0xf]
    %v53 = vld [vmem:[#allocation2 + $0x1c] sm:$0xf]
    %v54 = vld [vmem:[#allocation2 + $0x20] sm:$0xf]
    %v55 = vld [vmem:[#allocation2 + $0x24] sm:$0xf]
    %v56 = vld [vmem:[#allocation2 + $0x28] sm:$0xf]
    %v57 = vld [vmem:[#allocation2 + $0x2c] sm:$0xf]
    %v58 = vld [vmem:[#allocation2 + $0x30] sm:$0xf]
    %v59 = vld [vmem:[#allocation2 + $0x34] sm:$0xf]
    %v60 = vld [vmem:[#allocation2 + $0x38] sm:$0xf]
    %v61 = vld [vmem:[#allocation2 + $0x3c] sm:$0xf]
    %v62 = vld [vmem:[#allocation2 + $0x40] sm:$0xf]
    %v63 = vld [vmem:[#allocation2 + $0x44] sm:$0xf]
    %v64 = vld [vmem:[#allocation2 + $0x48] sm:$0xf]
    %v65 = vld [vmem:[#allocation2 + $0x4c] sm:$0xf]
    %v66 = vld [vmem:[#allocation2 + $0x50] sm:$0xf]
    %v67 = vld [vmem:[#allocation2 + $0x54] sm:$0xf]
    %v68 = vld [vmem:[#allocation2 + $0x58] sm:$0xf]
    %v69 = vld [vmem:[#allocation2 + $0x5c] sm:$0xf]
    %v70 = vld [vmem:[#allocation2 + $0x60] sm:$0xf]
    %v71 = vld [vmem:[#allocation2 + $0x64] sm:$0xf]
    %v72 = vld [vmem:[#allocation2 + $0x68] sm:$0xf]
    %v73 = vld [vmem:[#allocation2 + $0x6c] sm:$0xf]
    %v74 = vld [vmem:[#allocation2 + $0x70] sm:$0xf]
    %v75 = vld [vmem:[#allocation2 + $0x74] sm:$0xf]
    %v76 = vld [vmem:[#allocation2 + $0x78] sm:$0xf]
    %v77 = vld [vmem:[#allocation2 + $0x7c] sm:$0xf]
    %v78 = vld [vmem:[#allocation2 + $0x80] sm:$0xf]
    %v79 = vld [vmem:[#allocation2 + $0x84] sm:$0xf]
    %v80 = vld [vmem:[#allocation2 + $0x88] sm:$0xf]
    %v81 = vld [vmem:[#allocation2 + $0x8c] sm:$0xf]
    %v82 = vld [vmem:[#allocation2 + $0x90] sm:$0xf]
    %v83 = vld [vmem:[#allocation2 + $0x94] sm:$0xf]
    %v84 = vld [vmem:[#allocation2 + $0x98] sm:$0xf]
    %v85 = vld [vmem:[#allocation2 + $0x9c] sm:$0xf]
    %v86 = vld [vmem:[#allocation2 + $0xa0] sm:$0xf]
    %v87 = vld [vmem:[#allocation2 + $0xa4] sm:$0xf]
    %v88 = vld [vmem:[#allocation2 + $0xa8] sm:$0xf]
    %v89 = vld [vmem:[#allocation2 + $0xac] sm:$0xf]
    %v90 = vld [vmem:[#allocation2 + $0xb0] sm:$0xf]
    %v91 = vld [vmem:[#allocation2 + $0xb4] sm:$0xf]
    %v92 = vld [vmem:[#allocation2 + $0xb8] sm:$0xf]
    %v93 = vld [vmem:[#allocation2 + $0xbc] sm:$0xf]
    %v94 = vld [vmem:[#allocation2 + $0xc0] sm:$0xf]
    %v95 = vld [vmem:[#allocation2 + $0xc4] sm:$0xf]
    %v96 = vld [vmem:[#allocation2 + $0xc8] sm:$0xf]
    %v97 = vld [vmem:[#allocation2 + $0xcc] sm:$0xf]
    %v98 = vld [vmem:[#allocation2 + $0xd0] sm:$0xf]
    %v99 = vld [vmem:[#allocation2 + $0xd4] sm:$0xf]
    %v100 = vld [vmem:[#allocation2 + $0xd8] sm:$0xf]
    %v101 = vld [vmem:[#allocation2 + $0xdc] sm:$0xf]
    %v102 = vld [vmem:[#allocation2 + $0xe0] sm:$0xf]
    %v103 = vld [vmem:[#allocation2 + $0xe4] sm:$0xf]
    %v104 = vld [vmem:[#allocation2 + $0xe8] sm:$0xf]
    %v105 = vld [vmem:[#allocation2 + $0xec] sm:$0xf]
    %v106 = vld [vmem:[#allocation2 + $0xf0] sm:$0xf]
    %v107 = vld [vmem:[#allocation2 + $0xf4] sm:$0xf]
    %v108 = vld [vmem:[#allocation2 + $0xf8] sm:$0xf]
    %v109 = vld [vmem:[#allocation2 + $0xfc] sm:$0xf]
    %v110 = vld [vmem:[#allocation2 + $0x100] sm:$0xf]
    %v111 = vld [vmem:[#allocation2 + $0x104] sm:$0xf]
    %v112 = vld [vmem:[#allocation2 + $0x108] sm:$0xf]
    %v113 = vld [vmem:[#allocation2 + $0x10c] sm:$0xf]
    %v114 = vld [vmem:[#allocation2 + $0x110] sm:$0xf]
    %v115 = vld [vmem:[#allocation2 + $0x114] sm:$0xf]
    %v116 = vld [vmem:[#allocation2 + $0x118] sm:$0xf]
    %v117 = vld [vmem:[#allocation2 + $0x11c] sm:$0xf]
    %v118 = vld [vmem:[#allocation2 + $0x120] sm:$0xf]
    %v119 = vld [vmem:[#allocation2 + $0x124] sm:$0xf]
    %v120 = vld [vmem:[#allocation2 + $0x128] sm:$0xf]
    %v121 = vld [vmem:[#allocation2 + $0x12c] sm:$0xf]
    %v122 = vld [vmem:[#allocation2 + $0x130] sm:$0xf]
    %v123 = vld [vmem:[#allocation2 + $0x134] sm:$0xf]
    %v124 = vld [vmem:[#allocation2 + $0x138] sm:$0xf]
    %v125 = vld [vmem:[#allocation2 + $0x13c] sm:$0xf]
    %v126 = vld [vmem:[#allocation2 + $0x140] sm:$0xf]
    %v127 = vld [vmem:[#allocation2 + $0x144] sm:$0xf]
    %v128 = vld [vmem:[#allocation2 + $0x148] sm:$0xf]
    %v129 = vld [vmem:[#allocation2 + $0x14c] sm:$0xf]
    %v130 = vld [vmem:[#allocation2 + $0x150] sm:$0xf]
    %v131 = vld [vmem:[#allocation2 + $0x154] sm:$0xf]
    %v132 = vld [vmem:[#allocation2 + $0x158] sm:$0xf]
    %v133 = vld [vmem:[#allocation2 + $0x15c] sm:$0xf]
    %v134 = vld [vmem:[#allocation2 + $0x160] sm:$0xf]
    %v135 = vld [vmem:[#allocation2 + $0x164] sm:$0xf]
    %v136 = vld [vmem:[#allocation2 + $0x168] sm:$0xf]
    %v137 = vld [vmem:[#allocation2 + $0x16c] sm:$0xf]
    %v138 = vld [vmem:[#allocation2 + $0x170] sm:$0xf]
    %v139 = vld [vmem:[#allocation2 + $0x174] sm:$0xf]
    %v140 = vld [vmem:[#allocation2 + $0x178] sm:$0xf]
    %v141 = vld [vmem:[#allocation2 + $0x17c] sm:$0xf]
    %v142 = vld [vmem:[#allocation2 + $0x180] sm:$0xf]
    %v143 = vld [vmem:[#allocation2 + $0x184] sm:$0xf]
    %v144 = vld [vmem:[#allocation2 + $0x188] sm:$0xf]
    %v145 = vld [vmem:[#allocation2 + $0x18c] sm:$0xf]
    %v146 = vld [vmem:[#allocation2 + $0x190] sm:$0xf]
    %v147 = vld [vmem:[#allocation2 + $0x194] sm:$0xf]
    %v148 = vld [vmem:[#allocation2 + $0x198] sm:$0xf]
    %v149 = vld [vmem:[#allocation2 + $0x19c] sm:$0xf]
    %v150 = vld [vmem:[#allocation2 + $0x1a0] sm:$0xf]
    %v151 = vld [vmem:[#allocation2 + $0x1a4] sm:$0xf]
    %v152 = vld [vmem:[#allocation2 + $0x1a8] sm:$0xf]
    %v153 = vld [vmem:[#allocation2 + $0x1ac] sm:$0xf]
    %v154 = vld [vmem:[#allocation2 + $0x1b0] sm:$0xf]
    %v155 = vld [vmem:[#allocation2 + $0x1b4] sm:$0xf]
    %v156 = vld [vmem:[#allocation2 + $0x1b8] sm:$0xf]
    %v157 = vld [vmem:[#allocation2 + $0x1bc] sm:$0xf]
    %v158 = vld [vmem:[#allocation2 + $0x1c0] sm:$0xf]
    %v159 = vld [vmem:[#allocation2 + $0x1c4] sm:$0xf]
    %v160 = vld [vmem:[#allocation2 + $0x1c8] sm:$0xf]
    %v161 = vld [vmem:[#allocation2 + $0x1cc] sm:$0xf]
    %v162 = vld [vmem:[#allocation2 + $0x1d0] sm:$0xf]
    %v163 = vld [vmem:[#allocation2 + $0x1d4] sm:$0xf]
    %v164 = vld [vmem:[#allocation2 + $0x1d8] sm:$0xf]
    %v165 = vld [vmem:[#allocation2 + $0x1dc] sm:$0xf]
    %v166 = vld [vmem:[#allocation2 + $0x1e0] sm:$0xf]
    %v167 = vld [vmem:[#allocation2 + $0x1e4] sm:$0xf]
    %v168 = vld [vmem:[#allocation2 + $0x1e8] sm:$0xf]
    %v169 = vld [vmem:[#allocation2 + $0x1ec] sm:$0xf]
    %v170 = vld [vmem:[#allocation2 + $0x1f0] sm:$0xf]
    %v171 = vld [vmem:[#allocation2 + $0x1f4] sm:$0xf]
    %v172 = vld [vmem:[#allocation2 + $0x1f8] sm:$0xf]
    %v173 = vld [vmem:[#allocation2 + $0x1fc] sm:$0xf]
    %v182 = vunpack.c.l.b16 %v38
    %v183 = vunpack.c.h.b16 %v38
    %v184 = vunpack.c.l.b16 %v39
    %v185 = vunpack.c.h.b16 %v39
    %v186 = vunpack.c.l.b16 %v40
    %v187 = vunpack.c.h.b16 %v40
    %v188 = vunpack.c.l.b16 %v41
    %v189 = vunpack.c.h.b16 %v41
    %v190 = vunpack.c.l.b16 %v42
    %v191 = vunpack.c.h.b16 %v42
    %v192 = vunpack.c.l.b16 %v43
    %v193 = vunpack.c.h.b16 %v43
    %v194 = vunpack.c.l.b16 %v44
    %v195 = vunpack.c.h.b16 %v44
    %v196 = vunpack.c.l.b16 %v45
    %v197 = vunpack.c.h.b16 %v45
    %v198 = vpack.c.b16 %v190, %v182
    %v199 = vpack.c.b16 %v191, %v183
    %v200 = vpack.c.b16 %v192, %v184
    %v201 = vpack.c.b16 %v193, %v185
    %v202 = vpack.c.b16 %v194, %v186
    %v203 = vpack.c.b16 %v195, %v187
    %v204 = vpack.c.b16 %v196, %v188
    %v205 = vpack.c.b16 %v197, %v189
    %v342 = vunpack.c.l.b16 %v46
    %v343 = vunpack.c.l.b16 %v47
    %v344 = vunpack.c.l.b16 %v48
    %v345 = vunpack.c.l.b16 %v49
    %v346 = vunpack.c.l.b16 %v50
    %v347 = vunpack.c.l.b16 %v51
    %v348 = vunpack.c.l.b16 %v52
    %v349 = vunpack.c.l.b16 %v53
    %v350 = vunpack.c.l.b16 %v54
    %v351 = vunpack.c.l.b16 %v55
    %v352 = vunpack.c.l.b16 %v56
    %v353 = vunpack.c.l.b16 %v57
    %v354 = vunpack.c.l.b16 %v58
    %v355 = vunpack.c.l.b16 %v59
    %v356 = vunpack.c.l.b16 %v60
    %v357 = vunpack.c.l.b16 %v61
    %v358 = vunpack.c.l.b16 %v62
    %v359 = vunpack.c.l.b16 %v63
    %v360 = vunpack.c.l.b16 %v64
    %v361 = vunpack.c.l.b16 %v65
    %v362 = vunpack.c.l.b16 %v66
    %v363 = vunpack.c.l.b16 %v67
    %v364 = vunpack.c.l.b16 %v68
    %v365 = vunpack.c.l.b16 %v69
    %v366 = vunpack.c.l.b16 %v70
    %v367 = vunpack.c.l.b16 %v71
    %v368 = vunpack.c.l.b16 %v72
    %v369 = vunpack.c.l.b16 %v73
    %v370 = vunpack.c.l.b16 %v74
    %v371 = vunpack.c.l.b16 %v75
    %v372 = vunpack.c.l.b16 %v76
    %v373 = vunpack.c.l.b16 %v77
    %v374 = vunpack.c.l.b16 %v78
    %v375 = vunpack.c.l.b16 %v79
    %v376 = vunpack.c.l.b16 %v80
    %v377 = vunpack.c.l.b16 %v81
    %v378 = vunpack.c.l.b16 %v82
    %v379 = vunpack.c.l.b16 %v83
    %v380 = vunpack.c.l.b16 %v84
    %v381 = vunpack.c.l.b16 %v85
    %v382 = vunpack.c.l.b16 %v86
    %v383 = vunpack.c.l.b16 %v87
    %v384 = vunpack.c.l.b16 %v88
    %v385 = vunpack.c.l.b16 %v89
    %v386 = vunpack.c.l.b16 %v90
    %v387 = vunpack.c.l.b16 %v91
    %v388 = vunpack.c.l.b16 %v92
    %v389 = vunpack.c.l.b16 %v93
    %v390 = vunpack.c.l.b16 %v94
    %v391 = vunpack.c.l.b16 %v95
    %v392 = vunpack.c.l.b16 %v96
    %v393 = vunpack.c.l.b16 %v97
    %v394 = vunpack.c.l.b16 %v98
    %v395 = vunpack.c.l.b16 %v99
    %v396 = vunpack.c.l.b16 %v100
    %v397 = vunpack.c.l.b16 %v101
    %v398 = vunpack.c.l.b16 %v102
    %v399 = vunpack.c.l.b16 %v103
    %v400 = vunpack.c.l.b16 %v104
    %v401 = vunpack.c.l.b16 %v105
    %v402 = vunpack.c.l.b16 %v106
    %v403 = vunpack.c.l.b16 %v107
    %v404 = vunpack.c.l.b16 %v108
    %v405 = vunpack.c.l.b16 %v109
    %v406 = vunpack.c.l.b16 %v110
    %v407 = vunpack.c.l.b16 %v111
    %v408 = vunpack.c.l.b16 %v112
    %v409 = vunpack.c.l.b16 %v113
    %v410 = vunpack.c.l.b16 %v114
    %v411 = vunpack.c.l.b16 %v115
    %v412 = vunpack.c.l.b16 %v116
    %v413 = vunpack.c.l.b16 %v117
    %v414 = vunpack.c.l.b16 %v118
    %v415 = vunpack.c.l.b16 %v119
    %v416 = vunpack.c.l.b16 %v120
    %v417 = vunpack.c.l.b16 %v121
    %v418 = vunpack.c.l.b16 %v122
    %v419 = vunpack.c.l.b16 %v123
    %v420 = vunpack.c.l.b16 %v124
    %v421 = vunpack.c.l.b16 %v125
    %v422 = vunpack.c.l.b16 %v126
    %v423 = vunpack.c.l.b16 %v127
    %v424 = vunpack.c.l.b16 %v128
    %v425 = vunpack.c.l.b16 %v129
    %v426 = vunpack.c.l.b16 %v130
    %v427 = vunpack.c.l.b16 %v131
    %v428 = vunpack.c.l.b16 %v132
    %v429 = vunpack.c.l.b16 %v133
    %v430 = vunpack.c.l.b16 %v134
    %v431 = vunpack.c.l.b16 %v135
    %v432 = vunpack.c.l.b16 %v136
    %v433 = vunpack.c.l.b16 %v137
    %v434 = vunpack.c.l.b16 %v138
    %v435 = vunpack.c.l.b16 %v139
    %v436 = vunpack.c.l.b16 %v140
    %v437 = vunpack.c.l.b16 %v141
    %v438 = vunpack.c.l.b16 %v142
    %v439 = vunpack.c.l.b16 %v143
    %v440 = vunpack.c.l.b16 %v144
    %v441 = vunpack.c.l.b16 %v145
    %v442 = vunpack.c.l.b16 %v146
    %v443 = vunpack.c.l.b16 %v147
    %v444 = vunpack.c.l.b16 %v148
    %v445 = vunpack.c.l.b16 %v149
    %v446 = vunpack.c.l.b16 %v150
    %v447 = vunpack.c.l.b16 %v151
    %v448 = vunpack.c.l.b16 %v152
    %v449 = vunpack.c.l.b16 %v153
    %v450 = vunpack.c.l.b16 %v154
    %v451 = vunpack.c.l.b16 %v155
    %v452 = vunpack.c.l.b16 %v156
    %v453 = vunpack.c.l.b16 %v157
    %v454 = vunpack.c.l.b16 %v158
    %v455 = vunpack.c.l.b16 %v159
    %v456 = vunpack.c.l.b16 %v160
    %v457 = vunpack.c.l.b16 %v161
    %v458 = vunpack.c.l.b16 %v162
    %v459 = vunpack.c.l.b16 %v163
    %v460 = vunpack.c.l.b16 %v164
    %v461 = vunpack.c.l.b16 %v165
    %v462 = vunpack.c.l.b16 %v166
    %v463 = vunpack.c.l.b16 %v167
    %v464 = vunpack.c.l.b16 %v168
    %v465 = vunpack.c.l.b16 %v169
    %v466 = vunpack.c.l.b16 %v170
    %v467 = vunpack.c.l.b16 %v171
    %v468 = vunpack.c.l.b16 %v172
    %v469 = vunpack.c.l.b16 %v173
    %v470 = vpack.c.b16 %v343, %v342
    %v471 = vpack.c.b16 %v345, %v344
    %v472 = vpack.c.b16 %v347, %v346
    %v473 = vpack.c.b16 %v349, %v348
    %v474 = vpack.c.b16 %v351, %v350
    %v475 = vpack.c.b16 %v353, %v352
    %v476 = vpack.c.b16 %v355, %v354
    %v477 = vpack.c.b16 %v357, %v356
    %v478 = vpack.c.b16 %v359, %v358
    %v479 = vpack.c.b16 %v361, %v360
    %v480 = vpack.c.b16 %v363, %v362
    %v481 = vpack.c.b16 %v365, %v364
    %v482 = vpack.c.b16 %v367, %v366
    %v483 = vpack.c.b16 %v369, %v368
    %v484 = vpack.c.b16 %v371, %v370
    %v485 = vpack.c.b16 %v373, %v372
    %v486 = vpack.c.b16 %v375, %v374
    %v487 = vpack.c.b16 %v377, %v376
    %v488 = vpack.c.b16 %v379, %v378
    %v489 = vpack.c.b16 %v381, %v380
    %v490 = vpack.c.b16 %v383, %v382
    %v491 = vpack.c.b16 %v385, %v384
    %v492 = vpack.c.b16 %v387, %v386
    %v493 = vpack.c.b16 %v389, %v388
    %v494 = vpack.c.b16 %v391, %v390
    %v495 = vpack.c.b16 %v393, %v392
    %v496 = vpack.c.b16 %v395, %v394
    %v497 = vpack.c.b16 %v397, %v396
    %v498 = vpack.c.b16 %v399, %v398
    %v499 = vpack.c.b16 %v401, %v400
    %v500 = vpack.c.b16 %v403, %v402
    %v501 = vpack.c.b16 %v405, %v404
    %v502 = vpack.c.b16 %v407, %v406
    %v503 = vpack.c.b16 %v409, %v408
    %v504 = vpack.c.b16 %v411, %v410
    %v505 = vpack.c.b16 %v413, %v412
    %v506 = vpack.c.b16 %v415, %v414
    %v507 = vpack.c.b16 %v417, %v416
    %v508 = vpack.c.b16 %v419, %v418
    %v509 = vpack.c.b16 %v421, %v420
    %v510 = vpack.c.b16 %v423, %v422
    %v511 = vpack.c.b16 %v425, %v424
    %v512 = vpack.c.b16 %v427, %v426
    %v513 = vpack.c.b16 %v429, %v428
    %v514 = vpack.c.b16 %v431, %v430
    %v515 = vpack.c.b16 %v433, %v432
    %v516 = vpack.c.b16 %v435, %v434
    %v517 = vpack.c.b16 %v437, %v436
    %v518 = vpack.c.b16 %v439, %v438
    %v519 = vpack.c.b16 %v441, %v440
    %v520 = vpack.c.b16 %v443, %v442
    %v521 = vpack.c.b16 %v445, %v444
    %v522 = vpack.c.b16 %v447, %v446
    %v523 = vpack.c.b16 %v449, %v448
    %v524 = vpack.c.b16 %v451, %v450
    %v525 = vpack.c.b16 %v453, %v452
    %v526 = vpack.c.b16 %v455, %v454
    %v527 = vpack.c.b16 %v457, %v456
    %v528 = vpack.c.b16 %v459, %v458
    %v529 = vpack.c.b16 %v461, %v460
    %v530 = vpack.c.b16 %v463, %v462
    %v531 = vpack.c.b16 %v465, %v464
    %v532 = vpack.c.b16 %v467, %v466
    %v533 = vpack.c.b16 %v469, %v468
    %598 = vmatpush.bf16.msra.mxu0 %v477
    %599 = vmatpush.bf16.msra.mxu0 %v476
    %600 = vmatpush.bf16.msra.mxu0 %v475
    %601 = vmatpush.bf16.msra.mxu0 %v474
    %602 = vmatpush.bf16.msra.mxu0 %v473
    %603 = vmatpush.bf16.msra.mxu0 %v472
    %604 = vmatpush.bf16.msra.mxu0 %v471
    %605 = vmatpush.bf16.msra.mxu0 %v470
    %606 = vmatmul.bf16.gmra.mxu0 %v198
    %v607 = vpop.f32.mrf.mxu0
    %v608 = vadd.f32 0.0, %v607
    %v609 = vpop.f32.mrf.mxu0
    %v610 = vadd.f32 0.0, %v609
    %611 = vdwg.mxu0
    %612 = vmatpush.bf16.msra.mxu0 %v485
    %613 = vmatpush.bf16.msra.mxu0 %v484
    %614 = vmatpush.bf16.msra.mxu0 %v483
    %615 = vmatpush.bf16.msra.mxu0 %v482
    %616 = vmatpush.bf16.msra.mxu0 %v481
    %617 = vmatpush.bf16.msra.mxu0 %v480
    %618 = vmatpush.bf16.msra.mxu0 %v479
    %619 = vmatpush.bf16.msra.mxu0 %v478
    %620 = vmatmul.bf16.gmra.mxu0 %v199
    %v621 = vpop.f32.mrf.mxu0
    %v622 = vadd.f32 %v608, %v621
    %v623 = vpop.f32.mrf.mxu0
    %v624 = vadd.f32 %v610, %v623
    %625 = vdwg.mxu0
    %626 = vmatpush.bf16.msra.mxu0 %v493
    %627 = vmatpush.bf16.msra.mxu0 %v492
    %628 = vmatpush.bf16.msra.mxu0 %v491
    %629 = vmatpush.bf16.msra.mxu0 %v490
    %630 = vmatpush.bf16.msra.mxu0 %v489
    %631 = vmatpush.bf16.msra.mxu0 %v488
    %632 = vmatpush.bf16.msra.mxu0 %v487
    %633 = vmatpush.bf16.msra.mxu0 %v486
    %634 = vmatmul.bf16.gmra.mxu0 %v200
    %v635 = vpop.f32.mrf.mxu0
    %v636 = vadd.f32 %v622, %v635
    %v637 = vpop.f32.mrf.mxu0
    %v638 = vadd.f32 %v624, %v637
    %639 = vdwg.mxu0
    %640 = vmatpush.bf16.msra.mxu0 %v501
    %641 = vmatpush.bf16.msra.mxu0 %v500
    %642 = vmatpush.bf16.msra.mxu0 %v499
    %643 = vmatpush.bf16.msra.mxu0 %v498
    %644 = vmatpush.bf16.msra.mxu0 %v497
    %645 = vmatpush.bf16.msra.mxu0 %v496
    %646 = vmatpush.bf16.msra.mxu0 %v495
    %647 = vmatpush.bf16.msra.mxu0 %v494
    %648 = vmatmul.bf16.gmra.mxu0 %v201
    %v649 = vpop.f32.mrf.mxu0
    %v650 = vadd.f32 %v636, %v649
    %v651 = vpop.f32.mrf.mxu0
    %v652 = vadd.f32 %v638, %v651
    %653 = vdwg.mxu0
    %654 = vmatpush.bf16.msra.mxu0 %v509
    %655 = vmatpush.bf16.msra.mxu0 %v508
    %656 = vmatpush.bf16.msra.mxu0 %v507
    %657 = vmatpush.bf16.msra.mxu0 %v506
    %658 = vmatpush.bf16.msra.mxu0 %v505
    %659 = vmatpush.bf16.msra.mxu0 %v504
    %660 = vmatpush.bf16.msra.mxu0 %v503
    %661 = vmatpush.bf16.msra.mxu0 %v502
    %662 = vmatmul.bf16.gmra.mxu0 %v202
    %v663 = vpop.f32.mrf.mxu0
    %v664 = vadd.f32 %v650, %v663
    %v665 = vpop.f32.mrf.mxu0
    %v666 = vadd.f32 %v652, %v665
    %667 = vdwg.mxu0
    %668 = vmatpush.bf16.msra.mxu0 %v517
    %669 = vmatpush.bf16.msra.mxu0 %v516
    %670 = vmatpush.bf16.msra.mxu0 %v515
    %671 = vmatpush.bf16.msra.mxu0 %v514
    %672 = vmatpush.bf16.msra.mxu0 %v513
    %673 = vmatpush.bf16.msra.mxu0 %v512
    %674 = vmatpush.bf16.msra.mxu0 %v511
    %675 = vmatpush.bf16.msra.mxu0 %v510
    %676 = vmatmul.bf16.gmra.mxu0 %v203
    %v677 = vpop.f32.mrf.mxu0
    %v678 = vadd.f32 %v664, %v677
    %v679 = vpop.f32.mrf.mxu0
    %v680 = vadd.f32 %v666, %v679
    %681 = vdwg.mxu0
    %682 = vmatpush.bf16.msra.mxu0 %v525
    %683 = vmatpush.bf16.msra.mxu0 %v524
    %684 = vmatpush.bf16.msra.mxu0 %v523
    %685 = vmatpush.bf16.msra.mxu0 %v522
    %686 = vmatpush.bf16.msra.mxu0 %v521
    %687 = vmatpush.bf16.msra.mxu0 %v520
    %688 = vmatpush.bf16.msra.mxu0 %v519
    %689 = vmatpush.bf16.msra.mxu0 %v518
    %690 = vmatmul.bf16.gmra.mxu0 %v204
    %v691 = vpop.f32.mrf.mxu0
    %v692 = vadd.f32 %v678, %v691
    %v693 = vpop.f32.mrf.mxu0
    %v694 = vadd.f32 %v680, %v693
    %695 = vdwg.mxu0
    %696 = vmatpush.bf16.msra.mxu0 %v533
    %697 = vmatpush.bf16.msra.mxu0 %v532
    %698 = vmatpush.bf16.msra.mxu0 %v531
    %699 = vmatpush.bf16.msra.mxu0 %v530
    %700 = vmatpush.bf16.msra.mxu0 %v529
    %701 = vmatpush.bf16.msra.mxu0 %v528
    %702 = vmatpush.bf16.msra.mxu0 %v527
    %703 = vmatpush.bf16.msra.mxu0 %v526
    %704 = vmatmul.bf16.gmra.mxu0 %v205
    %v705 = vpop.f32.mrf.mxu0
    %v706 = vadd.f32 %v692, %v705
    %v707 = vpop.f32.mrf.mxu0
    %v708 = vadd.f32 %v694, %v707
    %709 = vdwg.mxu0
    %v710 = vadd.f32 %v36, %v706
    %v711 = vadd.f32 %v37, %v708
    %712 = vst [vmem:[%s3] sm:$0xff] %v710
    %713 = vst [vmem:[%s3 + $0x8] sm:$0xff] %v711
    // Predicated region
    $region22: #{input_layer_forward.1} parent=1 // pred_check
      %p714 = pneg %p30
    $region23: #{input_layer_forward.1} parent=1 // pred_check_branch
      %716 = sbr.rel (%p714) target = $region25
    $region24: #{input_layer_forward.1} parent=1 // pred_region
      %v717 = vld [vmem:[%s3] sm:$0xff]
      %v718 = vld [vmem:[%s3 + $0x8] sm:$0xff]
      %v719 = vld [vmem:[%s2] sm:$0x1]
      %v721 = vperm.slane %v719, 0
      %v723 = vadd.f32 %v717, %v721
      %v724 = vadd.f32 %v718, %v721
      %725 = vst [vmem:[%s3] sm:$0xff] %v723
      %726 = vst [vmem:[%s3 + $0x8] sm:$0xff] %v724
    $region25: #{input_layer_forward.1} parent=1 // pred_fallthru
      _
    // Predicated region
    $region26: #{input_layer_forward.1} parent=1 // pred_check
      _
    $region27: #{input_layer_forward.1} parent=1 // pred_check_branch
      %728 = sbr.rel (0) target = $region29
    $region28: #{input_layer_forward.1} parent=1 // pred_region
      _
    $region29: #{input_layer_forward.1} parent=1 // pred_fallthru
      _
    // Predicated region
    $region30: #{input_layer_forward.1} parent=1 // pred_check
      _
    $region31: #{input_layer_forward.1} parent=1 // pred_check_branch
      %730 = sbr.rel (0) target = $region33
    $region32: #{input_layer_forward.1} parent=1 // pred_region
      _
    $region33: #{input_layer_forward.1} parent=1 // pred_fallthru
      _
    %731 = vsyncpa [#allocation3], 1

</llo_original>
